<compile_context>
chip_gen: v6e
topology: v6e:2x2x1
jax: 0.10.0
libtpu: 0.0.40
codegen_flags: <defaults>
</compile_context>

<pallas_src>
import functools

import jax
import jax.numpy as jnp
from jax.experimental import pallas as pl
from jax.experimental.pallas import tpu as pltpu


def _dwsep_conv_kernel(x_ref, dw_ref, pw_ref, pb_ref, o_ref,
                       *, K, pad, H, W, B, C_in, C_out):
    """One batch-tile (B images) per grid step.

    x_ref  : (B*C_in,  H*W)   packed input images, spatially flattened (lane-dense)
    dw_ref : (B*C_in,  K*K)   depthwise weights, row = (b, c), col = kh*K + kw
    pw_ref : (C_out,   C_in)  pointwise (1x1) weights
    pb_ref : (C_out,   1)     pointwise bias (depthwise bias already folded in)
    o_ref  : (B*C_out, H*W)   packed output images, spatially flattened (lane-dense)
    """
    HW = H * W
    R_in = B * C_in

    # ---- one-time loads (no per-tap VMEM loads inside the unrolled loops) ----
    x = x_ref[...].astype(jnp.float32)                       # (R_in, HW)
    dw = dw_ref[...].astype(jnp.float32)                     # (R_in, K*K)
    pw = pw_ref[...].astype(jnp.float32)                     # (C_out, C_in)
    pb = pb_ref[...].astype(jnp.float32)                     # (C_out, 1)

    # ---- in-kernel spatial indices (replaces the old hw_idx HBM input) ----
    flat = jax.lax.broadcasted_iota(jnp.int32, (1, HW), 1)   # (1, HW)
    if W > 0 and (W & (W - 1)) == 0:                         # power-of-two fast path
        shift = W.bit_length() - 1
        h_idx = flat >> shift
        w_idx = flat & (W - 1)
    else:
        h_idx = flat // W
        w_idx = flat % W

    # ---- edge masks hoisted out of the tap loop, broadcast to sublanes once ----
    h_valid = {}
    for kh in range(K):
        dh = kh - pad
        if dh < 0:
            h_valid[dh] = jnp.broadcast_to(h_idx >= -dh, (R_in, HW))
        elif dh > 0:
            h_valid[dh] = jnp.broadcast_to(h_idx < H - dh, (R_in, HW))
        else:
            h_valid[dh] = None
    w_valid = {}
    for kw in range(K):
        dwd = kw - pad
        if dwd < 0:
            w_valid[dwd] = jnp.broadcast_to(w_idx >= -dwd, (R_in, HW))
        elif dwd > 0:
            w_valid[dwd] = jnp.broadcast_to(w_idx < W - dwd, (R_in, HW))
        else:
            w_valid[dwd] = None

    # ---- depthwise conv: K*K lane-rolled taps, zero padding via boundary masks ----
    acc = jnp.zeros((R_in, HW), jnp.float32)
    for kh in range(K):
        dh = kh - pad
        for kw in range(K):
            dwd = kw - pad
            d = dh * W + dwd
            t = kh * K + kw
            # shifted[r, s] == x[r, s + d]  (wrapped values get masked below)
            shifted = x if d == 0 else pltpu.roll(x, shift=(-d) % HW, axis=1)
            hm, wm = h_valid[dh], w_valid[dwd]
            if hm is not None and wm is not None:
                mask = jnp.logical_and(hm, wm)
            elif hm is not None:
                mask = hm
            elif wm is not None:
                mask = wm
            else:
                mask = None
            if mask is not None:
                shifted = jnp.where(mask, shifted, 0.0)
            tap = dw[:, t:t + 1]                              # (R_in, 1), in-register
            acc = acc + shifted * tap

    # ---- pointwise 1x1 conv: broadcast-FMAs on the VPU (MXU deliberately skipped) ----
    y_parts = []
    for b in range(B):
        yb = jnp.zeros((C_out, HW), jnp.float32)
        for ci in range(C_in):
            col = pw[:, ci:ci + 1]                            # (C_out, 1)
            row = b * C_in + ci
            yb = yb + col * acc[row:row + 1, :]               # (C_out,1)*(1,HW)
        y_parts.append(yb + pb)
    y = y_parts[0] if B == 1 else jnp.concatenate(y_parts, axis=0)   # (B*C_out, HW)

    o_ref[...] = y.astype(o_ref.dtype)       # lane-dense, unmasked store


def _pick_batch_tile(N, C_in, max_rows=32):
    """Smallest B dividing N with B*C_in % 8 == 0 (fills sublanes, keeps grid long)."""
    for B in range(1, N + 1):
        if N % B:
            continue
        rows = B * C_in
        if rows > max_rows:
            break
        if rows % 8 == 0:
            return B
    return 1


def depthwise_separable_conv(x_nchw, w_dw, b_dw, w_pw, b_pw, *, kernel_size, padding):
    """Wrapper matching the PyTorch module's forward (input/output are NCHW).

    w_dw: (C_in, 1, K, K)     depthwise conv weight (groups=C_in)
    b_dw: (C_in,)             depthwise conv bias
    w_pw: (C_out, C_in, 1, 1) pointwise conv weight
    b_pw: (C_out,)            pointwise conv bias
    """
    N, C_in, H, W = x_nchw.shape
    C_out = w_pw.shape[0]
    K = kernel_size
    # TODO(synk): fast path assumes 'same' output size (2*padding == K-1), which is how
    # the DCNet module is used; general padding needs an output lattice != input lattice.
    assert 2 * padding == K - 1, "supported config: 2*padding == kernel_size - 1"
    HW = H * W

    B = _pick_batch_tile(N, C_in)
    G = N // B
    R_in = B * C_in
    R_out = B * C_out

    # Pure reshapes only (no transpose / jnp.pad): NCHW -> (G, B*C_in, H*W).
    x = x_nchw.reshape(G, R_in, HW)

    # Repack parameters (tiny, done once, XLA-fused).
    dw_base = w_dw[:, 0, :, :].reshape(C_in, K * K)           # (C_in, K*K)
    dw_k = jnp.tile(dw_base, (B, 1))                          # (B*C_in, K*K)
    pw_k = w_pw[:, :, 0, 0]                                   # (C_out, C_in)
    # Fold depthwise bias into pointwise bias: pb' = pb + W_pw @ db.
    pb_k = (b_pw + pw_k @ b_dw).reshape(C_out, 1)             # (C_out, 1)

    kernel = functools.partial(_dwsep_conv_kernel, K=K, pad=padding, H=H, W=W,
                               B=B, C_in=C_in, C_out=C_out)

    out = pl.pallas_call(
        kernel,
        out_shape=jax.ShapeDtypeStruct((G, R_out, HW), x_nchw.dtype),
        grid=(G,),
        in_specs=[
            pl.BlockSpec((pl.Squeezed(), R_in, HW), lambda g: (g, 0, 0)),   # x
            pl.BlockSpec((R_in, K * K), lambda g: (0, 0)),                  # dw taps
            pl.BlockSpec((C_out, C_in), lambda g: (0, 0)),                  # pw weights
            pl.BlockSpec((C_out, 1), lambda g: (0, 0)),                     # fused bias
        ],
        out_specs=pl.BlockSpec((pl.Squeezed(), R_out, HW), lambda g: (g, 0, 0)),
        compiler_params=pltpu.CompilerParams(
            dimension_semantics=("parallel",),   # >=2 grid steps -> both TCs on v7x
            vmem_limit_bytes=32 * 1024 * 1024,   # far above the few-KB per-step need
        ),
    )(x, dw_k, pw_k, pb_k)

    # Pure reshape back to NCHW (channels-leading layout => no transpose needed).
    return out.reshape(N, C_out, H, W)


def _reference(x_nchw, w_dw, b_dw, w_pw, b_pw, *, padding):
    """Pure-JAX reference using lax.conv_general_dilated (PyTorch semantics)."""
    C_in = x_nchw.shape[1]
    y = jax.lax.conv_general_dilated(
        x_nchw, w_dw, window_strides=(1, 1),
        padding=[(padding, padding), (padding, padding)],
        dimension_numbers=('NCHW', 'OIHW', 'NCHW'),
        feature_group_count=C_in)
    y = y + b_dw.reshape(1, -1, 1, 1)
    z = jax.lax.conv_general_dilated(
        y, w_pw, window_strides=(1, 1), padding=[(0, 0), (0, 0)],
        dimension_numbers=('NCHW', 'OIHW', 'NCHW'))
    z = z + b_pw.reshape(1, -1, 1, 1)
    return z


if __name__ == "__main__":
    # Module config: DepthwiseSeparableConv(in_channels=4, out_channels=8,
    #                                       kernel_size=3, padding=1)
    # N=4 so that with B=2 images packed per grid step the grid still has 2 steps
    # (exercises the v7x dual-TensorCore "parallel" path).
    N, C_in, H, W = 4, 4, 16, 16
    C_out, K, padding = 8, 3, 1

    key = jax.random.PRNGKey(0)
    k_x, k_dw, k_db, k_pw, k_pb = jax.random.split(key, 5)

    x = jax.random.normal(k_x, (N, C_in, H, W), jnp.float32)

    # Parameter shapes follow nn.Conv2d in the module's __init__.
    w_dw = 0.1 * jax.random.normal(k_dw, (C_in, 1, K, K), jnp.float32)      # depthwise
    b_dw = 0.1 * jax.random.normal(k_db, (C_in,), jnp.float32)
    w_pw = 0.1 * jax.random.normal(k_pw, (C_out, C_in, 1, 1), jnp.float32)  # pointwise
    b_pw = 0.1 * jax.random.normal(k_pb, (C_out,), jnp.float32)

    out = depthwise_separable_conv(x, w_dw, b_dw, w_pw, b_pw,
                                   kernel_size=K, padding=padding)
    out = jax.block_until_ready(out)

    ref = jax.block_until_ready(_reference(x, w_dw, b_dw, w_pw, b_pw, padding=padding))

    assert out.shape == ref.shape == (N, C_out, H, W), (out.shape, ref.shape)
    assert jnp.allclose(out, ref, atol=1e-4, rtol=1e-4), float(jnp.max(jnp.abs(out - ref)))

    print("KERNEL_OK")
</pallas_src>

<mosaic_0001>
module attributes {stable_mosaic.version = 11 : i64} {
  func.func @_dwsep_conv_kernel(%arg0: i32, %arg1: memref<1x8x256xf32, #tpu.memory_space<vmem>>, %arg2: memref<8x9xf32, #tpu.memory_space<vmem>>, %arg3: memref<8x4xf32, #tpu.memory_space<vmem>>, %arg4: memref<8x1xf32, #tpu.memory_space<vmem>>, %arg5: memref<1x16x256xf32, #tpu.memory_space<vmem>>) attributes {dimension_semantics = [#tpu.dimension_semantics<parallel>], iteration_bounds = array<i64: 2>, scalar_prefetch = 0 : i64, scratch_operands = 0 : i64, tpu.core_type = #tpu.core_type<tc>, window_params = [{transform_indices = @transform_0, window_bounds = array<i64: 1, 8, 256>}, {pipeline_mode = #tpu.pipeline_mode<synchronous>, transform_indices = @transform_1, window_bounds = array<i64: 8, 9>}, {pipeline_mode = #tpu.pipeline_mode<synchronous>, transform_indices = @transform_2, window_bounds = array<i64: 8, 4>}, {pipeline_mode = #tpu.pipeline_mode<synchronous>, transform_indices = @transform_3, window_bounds = array<i64: 8, 1>}, {transform_indices = @transform_4, window_bounds = array<i64: 1, 16, 256>}]} {
    %c0 = arith.constant 0 : index
    %c0_0 = arith.constant 0 : index
    %c0_1 = arith.constant 0 : index
    %0 = vector.load %arg1[%c0, %c0_0, %c0_1] : memref<1x8x256xf32, #tpu.memory_space<vmem>>, vector<1x8x256xf32>
    %1 = vector.shape_cast %0 : vector<1x8x256xf32> to vector<8x256xf32>
    %c0_2 = arith.constant 0 : index
    %c0_3 = arith.constant 0 : index
    %2 = vector.load %arg2[%c0_2, %c0_3] : memref<8x9xf32, #tpu.memory_space<vmem>>, vector<8x9xf32>
    %c0_4 = arith.constant 0 : index
    %c0_5 = arith.constant 0 : index
    %3 = vector.load %arg3[%c0_4, %c0_5] : memref<8x4xf32, #tpu.memory_space<vmem>>, vector<8x4xf32>
    %c0_6 = arith.constant 0 : index
    %c0_7 = arith.constant 0 : index
    %4 = vector.load %arg4[%c0_6, %c0_7] : memref<8x1xf32, #tpu.memory_space<vmem>>, vector<8x1xf32>
    %5 = tpu.iota {dimensions = array<i32: 1>} : vector<1x256xi32>
    %c4_i32 = arith.constant 4 : i32
    %6 = vector.broadcast %c4_i32 : i32 to vector<1x256xi32>
    %7 = arith.shrsi %5, %6 : vector<1x256xi32>
    %c15_i32 = arith.constant 15 : i32
    %8 = vector.broadcast %c15_i32 : i32 to vector<1x256xi32>
    %9 = arith.andi %5, %8 : vector<1x256xi32>
    %c1_i32 = arith.constant 1 : i32
    %10 = vector.broadcast %c1_i32 : i32 to vector<1x256xi32>
    %11 = arith.cmpi sge, %7, %10 : vector<1x256xi32>
    %12 = vector.shape_cast %11 : vector<1x256xi1> to vector<1x256xi1>
    %13 = vector.broadcast %12 : vector<1x256xi1> to vector<8x256xi1>
    %c15_i32_8 = arith.constant 15 : i32
    %14 = vector.broadcast %c15_i32_8 : i32 to vector<1x256xi32>
    %15 = arith.cmpi slt, %7, %14 : vector<1x256xi32>
    %16 = vector.shape_cast %15 : vector<1x256xi1> to vector<1x256xi1>
    %17 = vector.broadcast %16 : vector<1x256xi1> to vector<8x256xi1>
    %c1_i32_9 = arith.constant 1 : i32
    %18 = vector.broadcast %c1_i32_9 : i32 to vector<1x256xi32>
    %19 = arith.cmpi sge, %9, %18 : vector<1x256xi32>
    %20 = vector.shape_cast %19 : vector<1x256xi1> to vector<1x256xi1>
    %21 = vector.broadcast %20 : vector<1x256xi1> to vector<8x256xi1>
    %c15_i32_10 = arith.constant 15 : i32
    %22 = vector.broadcast %c15_i32_10 : i32 to vector<1x256xi32>
    %23 = arith.cmpi slt, %9, %22 : vector<1x256xi32>
    %24 = vector.shape_cast %23 : vector<1x256xi1> to vector<1x256xi1>
    %25 = vector.broadcast %24 : vector<1x256xi1> to vector<8x256xi1>
    %cst = arith.constant 0.000000e+00 : f32
    %26 = vector.broadcast %cst : f32 to vector<8x256xf32>
    %c17_i32 = arith.constant 17 : i32
    %27 = tpu.dynamic_rotate %1 by %c17_i32 dim 1 : vector<8x256xf32>, i32 -> vector<8x256xf32>
    %28 = arith.andi %13, %21 : vector<8x256xi1>
    %cst_11 = arith.constant 0.000000e+00 : f32
    %29 = vector.broadcast %cst_11 : f32 to vector<8x256xf32>
    %30 = arith.select %28, %27, %29 : vector<8x256xi1>, vector<8x256xf32>
    %31 = vector.extract_strided_slice %2 {offsets = [0, 0], sizes = [8, 1], strides = [1, 1]} : vector<8x9xf32> to vector<8x1xf32>
    %32 = vector.broadcast %31 : vector<8x1xf32> to vector<8x256xf32>
    %33 = arith.mulf %30, %32 : vector<8x256xf32>
    %34 = arith.addf %26, %33 : vector<8x256xf32>
    %c16_i32 = arith.constant 16 : i32
    %35 = tpu.dynamic_rotate %1 by %c16_i32 dim 1 : vector<8x256xf32>, i32 -> vector<8x256xf32>
    %cst_12 = arith.constant 0.000000e+00 : f32
    %36 = vector.broadcast %cst_12 : f32 to vector<8x256xf32>
    %37 = arith.select %13, %35, %36 : vector<8x256xi1>, vector<8x256xf32>
    %38 = vector.extract_strided_slice %2 {offsets = [0, 1], sizes = [8, 1], strides = [1, 1]} : vector<8x9xf32> to vector<8x1xf32>
    %39 = vector.broadcast %38 : vector<8x1xf32> to vector<8x256xf32>
    %40 = arith.mulf %37, %39 : vector<8x256xf32>
    %41 = arith.addf %34, %40 : vector<8x256xf32>
    %c15_i32_13 = arith.constant 15 : i32
    %42 = tpu.dynamic_rotate %1 by %c15_i32_13 dim 1 : vector<8x256xf32>, i32 -> vector<8x256xf32>
    %43 = arith.andi %13, %25 : vector<8x256xi1>
    %cst_14 = arith.constant 0.000000e+00 : f32
    %44 = vector.broadcast %cst_14 : f32 to vector<8x256xf32>
    %45 = arith.select %43, %42, %44 : vector<8x256xi1>, vector<8x256xf32>
    %46 = vector.extract_strided_slice %2 {offsets = [0, 2], sizes = [8, 1], strides = [1, 1]} : vector<8x9xf32> to vector<8x1xf32>
    %47 = vector.broadcast %46 : vector<8x1xf32> to vector<8x256xf32>
    %48 = arith.mulf %45, %47 : vector<8x256xf32>
    %49 = arith.addf %41, %48 : vector<8x256xf32>
    %c1_i32_15 = arith.constant 1 : i32
    %50 = tpu.dynamic_rotate %1 by %c1_i32_15 dim 1 : vector<8x256xf32>, i32 -> vector<8x256xf32>
    %cst_16 = arith.constant 0.000000e+00 : f32
    %51 = vector.broadcast %cst_16 : f32 to vector<8x256xf32>
    %52 = arith.select %21, %50, %51 : vector<8x256xi1>, vector<8x256xf32>
    %53 = vector.extract_strided_slice %2 {offsets = [0, 3], sizes = [8, 1], strides = [1, 1]} : vector<8x9xf32> to vector<8x1xf32>
    %54 = vector.broadcast %53 : vector<8x1xf32> to vector<8x256xf32>
    %55 = arith.mulf %52, %54 : vector<8x256xf32>
    %56 = arith.addf %49, %55 : vector<8x256xf32>
    %57 = vector.extract_strided_slice %2 {offsets = [0, 4], sizes = [8, 1], strides = [1, 1]} : vector<8x9xf32> to vector<8x1xf32>
    %58 = vector.broadcast %57 : vector<8x1xf32> to vector<8x256xf32>
    %59 = arith.mulf %1, %58 : vector<8x256xf32>
    %60 = arith.addf %56, %59 : vector<8x256xf32>
    %c255_i32 = arith.constant 255 : i32
    %61 = tpu.dynamic_rotate %1 by %c255_i32 dim 1 : vector<8x256xf32>, i32 -> vector<8x256xf32>
    %cst_17 = arith.constant 0.000000e+00 : f32
    %62 = vector.broadcast %cst_17 : f32 to vector<8x256xf32>
    %63 = arith.select %25, %61, %62 : vector<8x256xi1>, vector<8x256xf32>
    %64 = vector.extract_strided_slice %2 {offsets = [0, 5], sizes = [8, 1], strides = [1, 1]} : vector<8x9xf32> to vector<8x1xf32>
    %65 = vector.broadcast %64 : vector<8x1xf32> to vector<8x256xf32>
    %66 = arith.mulf %63, %65 : vector<8x256xf32>
    %67 = arith.addf %60, %66 : vector<8x256xf32>
    %c241_i32 = arith.constant 241 : i32
    %68 = tpu.dynamic_rotate %1 by %c241_i32 dim 1 : vector<8x256xf32>, i32 -> vector<8x256xf32>
    %69 = arith.andi %17, %21 : vector<8x256xi1>
    %cst_18 = arith.constant 0.000000e+00 : f32
    %70 = vector.broadcast %cst_18 : f32 to vector<8x256xf32>
    %71 = arith.select %69, %68, %70 : vector<8x256xi1>, vector<8x256xf32>
    %72 = vector.extract_strided_slice %2 {offsets = [0, 6], sizes = [8, 1], strides = [1, 1]} : vector<8x9xf32> to vector<8x1xf32>
    %73 = vector.broadcast %72 : vector<8x1xf32> to vector<8x256xf32>
    %74 = arith.mulf %71, %73 : vector<8x256xf32>
    %75 = arith.addf %67, %74 : vector<8x256xf32>
    %c240_i32 = arith.constant 240 : i32
    %76 = tpu.dynamic_rotate %1 by %c240_i32 dim 1 : vector<8x256xf32>, i32 -> vector<8x256xf32>
    %cst_19 = arith.constant 0.000000e+00 : f32
    %77 = vector.broadcast %cst_19 : f32 to vector<8x256xf32>
    %78 = arith.select %17, %76, %77 : vector<8x256xi1>, vector<8x256xf32>
    %79 = vector.extract_strided_slice %2 {offsets = [0, 7], sizes = [8, 1], strides = [1, 1]} : vector<8x9xf32> to vector<8x1xf32>
    %80 = vector.broadcast %79 : vector<8x1xf32> to vector<8x256xf32>
    %81 = arith.mulf %78, %80 : vector<8x256xf32>
    %82 = arith.addf %75, %81 : vector<8x256xf32>
    %c239_i32 = arith.constant 239 : i32
    %83 = tpu.dynamic_rotate %1 by %c239_i32 dim 1 : vector<8x256xf32>, i32 -> vector<8x256xf32>
    %84 = arith.andi %17, %25 : vector<8x256xi1>
    %cst_20 = arith.constant 0.000000e+00 : f32
    %85 = vector.broadcast %cst_20 : f32 to vector<8x256xf32>
    %86 = arith.select %84, %83, %85 : vector<8x256xi1>, vector<8x256xf32>
    %87 = vector.extract_strided_slice %2 {offsets = [0, 8], sizes = [8, 1], strides = [1, 1]} : vector<8x9xf32> to vector<8x1xf32>
    %88 = vector.broadcast %87 : vector<8x1xf32> to vector<8x256xf32>
    %89 = arith.mulf %86, %88 : vector<8x256xf32>
    %90 = arith.addf %82, %89 : vector<8x256xf32>
    %cst_21 = arith.constant 0.000000e+00 : f32
    %91 = vector.broadcast %cst_21 : f32 to vector<8x256xf32>
    %92 = vector.extract_strided_slice %3 {offsets = [0, 0], sizes = [8, 1], strides = [1, 1]} : vector<8x4xf32> to vector<8x1xf32>
    %93 = vector.extract_strided_slice %90 {offsets = [0, 0], sizes = [1, 256], strides = [1, 1]} : vector<8x256xf32> to vector<1x256xf32>
    %94 = vector.broadcast %92 : vector<8x1xf32> to vector<8x256xf32>
    %95 = vector.broadcast %93 : vector<1x256xf32> to vector<8x256xf32>
    %96 = arith.mulf %94, %95 : vector<8x256xf32>
    %97 = arith.addf %91, %96 : vector<8x256xf32>
    %98 = vector.extract_strided_slice %3 {offsets = [0, 1], sizes = [8, 1], strides = [1, 1]} : vector<8x4xf32> to vector<8x1xf32>
    %99 = vector.extract_strided_slice %90 {offsets = [1, 0], sizes = [1, 256], strides = [1, 1]} : vector<8x256xf32> to vector<1x256xf32>
    %100 = vector.broadcast %98 : vector<8x1xf32> to vector<8x256xf32>
    %101 = vector.broadcast %99 : vector<1x256xf32> to vector<8x256xf32>
    %102 = arith.mulf %100, %101 : vector<8x256xf32>
    %103 = arith.addf %97, %102 : vector<8x256xf32>
    %104 = vector.extract_strided_slice %3 {offsets = [0, 2], sizes = [8, 1], strides = [1, 1]} : vector<8x4xf32> to vector<8x1xf32>
    %105 = vector.extract_strided_slice %90 {offsets = [2, 0], sizes = [1, 256], strides = [1, 1]} : vector<8x256xf32> to vector<1x256xf32>
    %106 = vector.broadcast %104 : vector<8x1xf32> to vector<8x256xf32>
    %107 = vector.broadcast %105 : vector<1x256xf32> to vector<8x256xf32>
    %108 = arith.mulf %106, %107 : vector<8x256xf32>
    %109 = arith.addf %103, %108 : vector<8x256xf32>
    %110 = vector.extract_strided_slice %3 {offsets = [0, 3], sizes = [8, 1], strides = [1, 1]} : vector<8x4xf32> to vector<8x1xf32>
    %111 = vector.extract_strided_slice %90 {offsets = [3, 0], sizes = [1, 256], strides = [1, 1]} : vector<8x256xf32> to vector<1x256xf32>
    %112 = vector.broadcast %110 : vector<8x1xf32> to vector<8x256xf32>
    %113 = vector.broadcast %111 : vector<1x256xf32> to vector<8x256xf32>
    %114 = arith.mulf %112, %113 : vector<8x256xf32>
    %115 = arith.addf %109, %114 : vector<8x256xf32>
    %116 = vector.broadcast %4 : vector<8x1xf32> to vector<8x256xf32>
    %117 = arith.addf %115, %116 : vector<8x256xf32>
    %cst_22 = arith.constant 0.000000e+00 : f32
    %118 = vector.broadcast %cst_22 : f32 to vector<8x256xf32>
    %119 = vector.extract_strided_slice %3 {offsets = [0, 0], sizes = [8, 1], strides = [1, 1]} : vector<8x4xf32> to vector<8x1xf32>
    %120 = vector.extract_strided_slice %90 {offsets = [4, 0], sizes = [1, 256], strides = [1, 1]} : vector<8x256xf32> to vector<1x256xf32>
    %121 = vector.broadcast %119 : vector<8x1xf32> to vector<8x256xf32>
    %122 = vector.broadcast %120 : vector<1x256xf32> to vector<8x256xf32>
    %123 = arith.mulf %121, %122 : vector<8x256xf32>
    %124 = arith.addf %118, %123 : vector<8x256xf32>
    %125 = vector.extract_strided_slice %3 {offsets = [0, 1], sizes = [8, 1], strides = [1, 1]} : vector<8x4xf32> to vector<8x1xf32>
    %126 = vector.extract_strided_slice %90 {offsets = [5, 0], sizes = [1, 256], strides = [1, 1]} : vector<8x256xf32> to vector<1x256xf32>
    %127 = vector.broadcast %125 : vector<8x1xf32> to vector<8x256xf32>
    %128 = vector.broadcast %126 : vector<1x256xf32> to vector<8x256xf32>
    %129 = arith.mulf %127, %128 : vector<8x256xf32>
    %130 = arith.addf %124, %129 : vector<8x256xf32>
    %131 = vector.extract_strided_slice %3 {offsets = [0, 2], sizes = [8, 1], strides = [1, 1]} : vector<8x4xf32> to vector<8x1xf32>
    %132 = vector.extract_strided_slice %90 {offsets = [6, 0], sizes = [1, 256], strides = [1, 1]} : vector<8x256xf32> to vector<1x256xf32>
    %133 = vector.broadcast %131 : vector<8x1xf32> to vector<8x256xf32>
    %134 = vector.broadcast %132 : vector<1x256xf32> to vector<8x256xf32>
    %135 = arith.mulf %133, %134 : vector<8x256xf32>
    %136 = arith.addf %130, %135 : vector<8x256xf32>
    %137 = vector.extract_strided_slice %3 {offsets = [0, 3], sizes = [8, 1], strides = [1, 1]} : vector<8x4xf32> to vector<8x1xf32>
    %138 = vector.extract_strided_slice %90 {offsets = [7, 0], sizes = [1, 256], strides = [1, 1]} : vector<8x256xf32> to vector<1x256xf32>
    %139 = vector.broadcast %137 : vector<8x1xf32> to vector<8x256xf32>
    %140 = vector.broadcast %138 : vector<1x256xf32> to vector<8x256xf32>
    %141 = arith.mulf %139, %140 : vector<8x256xf32>
    %142 = arith.addf %136, %141 : vector<8x256xf32>
    %143 = vector.broadcast %4 : vector<8x1xf32> to vector<8x256xf32>
    %144 = arith.addf %142, %143 : vector<8x256xf32>
    %145 = tpu.concatenate %117, %144 in 0 : vector<8x256xf32>, vector<8x256xf32> -> vector<16x256xf32>
    %c0_23 = arith.constant 0 : index
    %c0_24 = arith.constant 0 : index
    %c0_25 = arith.constant 0 : index
    %146 = vector.load %arg5[%c0_23, %c0_24, %c0_25] : memref<1x16x256xf32, #tpu.memory_space<vmem>>, vector<1x16x256xf32>
    %147 = vector.shape_cast %146 : vector<1x16x256xf32> to vector<16x256xf32>
    %148 = vector.shape_cast %145 : vector<16x256xf32> to vector<1x16x256xf32>
    tpu.vector_store %arg5[%c0_23, %c0_24, %c0_25], %148 {strides = array<i32>} : memref<1x16x256xf32, #tpu.memory_space<vmem>>, vector<1x16x256xf32>,
    return
  }
  func.func @transform_0(%arg0: i32) -> (i32, i32, i32) {
    %c0_i32 = arith.constant 0 : i32
    %c0_i32_0 = arith.constant 0 : i32
    %c0_i32_1 = arith.constant 0 : i32
    return %arg0, %c0_i32, %c0_i32_0 : i32, i32, i32
  }
  func.func @transform_1(%arg0: i32) -> (i32, i32) {
    %c0_i32 = arith.constant 0 : i32
    %c0_i32_0 = arith.constant 0 : i32
    %c0_i32_1 = arith.constant 0 : i32
    return %c0_i32, %c0_i32_0 : i32, i32
  }
  func.func @transform_2(%arg0: i32) -> (i32, i32) {
    %c0_i32 = arith.constant 0 : i32
    %c0_i32_0 = arith.constant 0 : i32
    %c0_i32_1 = arith.constant 0 : i32
    return %c0_i32, %c0_i32_0 : i32, i32
  }
  func.func @transform_3(%arg0: i32) -> (i32, i32) {
    %c0_i32 = arith.constant 0 : i32
    %c0_i32_0 = arith.constant 0 : i32
    %c0_i32_1 = arith.constant 0 : i32
    return %c0_i32, %c0_i32_0 : i32, i32
  }
  func.func @transform_4(%arg0: i32) -> (i32, i32, i32) {
    %c0_i32 = arith.constant 0 : i32
    %c0_i32_0 = arith.constant 0 : i32
    %c0_i32_1 = arith.constant 0 : i32
    return %arg0, %c0_i32, %c0_i32_0 : i32, i32, i32
  }
}

</mosaic_0001>

<llo_original>
// kernel: tpu_custom_call.1
$region0: #{tpu_custom_call.1}
  #allocation0 [shape = 'u32[]', space=smem, size = 0x4, offset = 0x4, fixed_abs, tag = 'smem constant byte address 0x4 - core index']
  #allocation1 [shape = 'u32[144,128]{1,0:T(1,128)}', space=vmem, size = 0x12000, scoped, tag = 'internal scratch']
  %s0 = inlined_call_operand.hbm [shape: f32[2,8,256], index: 0, kind: input, shape index: {}]
  %s1 = inlined_call_operand.vmem [shape: f32[8,9], index: 1, kind: input, shape index: {}]
  %s2 = inlined_call_operand.vmem [shape: f32[8,4], index: 2, kind: input, shape index: {}]
  %s3 = inlined_call_operand.vmem [shape: f32[8,1], index: 3, kind: input, shape index: {}]
  %s4 = inlined_call_operand.hbm [shape: f32[2,16,256], index: 4, kind: output, shape index: {}]
  %s5 = sld [smem:[#allocation0]]
  $region53: #{tpu_custom_call.1} parent=0
    _
  %s7 = ssub.s32 1, %s5
  %s8 = scalar_select 0, %s7, %s5
  $region1: #{tpu_custom_call.1} parent=0
    #allocation2 [shape = 'u8[16384]{0}', space=vmem, size = 0x4000, scoped, tag = 'input window, operand 0']
    #allocation3 [shape = 's32[2]{0}', space=sflag, size = 0x8, scoped, tag = 'scoped memory for tpu_custom_call.1']
    #allocation4 [shape = 's32[2]{0}', space=sflag, size = 0x8, scoped, tag = 'scoped memory for tpu_custom_call.1']
    #allocation5 [shape = 'u8[32768]{0}', space=vmem, size = 0x8000, scoped, tag = 'output window, operand 0']
    %9 = vsyncpa [#allocation3], 0
    %s10 = scalar_lea.sflag [#allocation3], 1
    %11 = vsyncpa %s10, 0
    %12 = vsyncpa [#allocation4], 0
    %s13 = scalar_lea.sflag [#allocation4], 1
    %14 = vsyncpa %s13, 0
    loop: start=0, step=1, limit=4
    $region2: #{tpu_custom_call.1} parent=1 // loop_pre_header
      _
    $region3: #{tpu_custom_call.1} parent=1 // loop_header
      %s16 = sphi 0, %s20
      %p17 = scmp.ge.s32.totalorder %s16, 4
      %s26 = sphi 0, %s28
      %s29 = sphi 0, %s26
      %s30 = sphi 0, %s29
      %s46 = sphi 0, %s30
      %s50 = sphi 0, %s50
      %s52 = sphi 0, %s50
      %s53 = sphi 0, %s52
      %s67 = sphi 0, %s53
      %s71 = sphi 0, %s71
      %s73 = sphi 0, %s71
      %s74 = sphi 0, %s73
      %s88 = sphi 0, %s74
      %s92 = sphi 0, %s92
      %s94 = sphi 0, %s92
      %s95 = sphi 0, %s94
      %s109 = sphi 0, %s95
      %s115 = sphi 0, %s117
      %s118 = sphi 0, %s115
      %s119 = sphi 0, %s118
      %s135 = sphi 0, %s119
    $region4: #{tpu_custom_call.1} parent=1 // loop_header_branch
      %19 = sbr.rel (%p17) target = $region8
    $region5: #{tpu_custom_call.1} parent=1 // loop_body
      %s21 = ssub.s32 %s16, 1
      %s22 = ssub.s32 %s16, 2
      %s23 = sadd.s32 %s16, 1
      %s24 = ssub.s32 %s16, %s23
      %p25 = scmp.eq.s32.totalorder %s24, 0
      %s27 = sadd.s32 %s26, 1
      %s28 = scalar_select %p25, %s26, %s27
      %p31 = pneg %p25
      %p32 = scmp.eq.s32.totalorder %s16, 1
      %p33 = por %p31, %p32
      %p34 = scmp.ne.s32.totalorder %s26, %s29
      %p35 = scmp.eq.s32.totalorder %s16, 0
      %p36 = por %p34, %p35
      %p37 = scmp.ne.s32.totalorder %s26, %s29
      %p38 = scmp.eq.s32.totalorder %s21, 1
      %p39 = por %p37, %p38
      %p40 = scmp.ne.s32.totalorder %s29, %s30
      %p41 = scmp.eq.s32.totalorder %s21, 0
      %p42 = por %p40, %p41
      %p43 = scmp.ne.s32.totalorder %s29, %s30
      %p44 = scmp.eq.s32.totalorder %s22, 1
      %p45 = por %p43, %p44
      %p47 = scmp.ne.s32.totalorder %s30, %s46
      %p48 = scmp.eq.s32.totalorder %s22, 0
      %p49 = por %p47, %p48
      %s51 = sadd.s32 %s50, 1
      %p54 = scmp.eq.s32.totalorder %s16, 1
      %p55 = scmp.ne.s32.totalorder %s50, %s52
      %p56 = scmp.eq.s32.totalorder %s16, 0
      %p57 = por %p55, %p56
      %p58 = scmp.ne.s32.totalorder %s50, %s52
      %p59 = scmp.eq.s32.totalorder %s21, 1
      %p60 = por %p58, %p59
      %p61 = scmp.ne.s32.totalorder %s52, %s53
      %p62 = scmp.eq.s32.totalorder %s21, 0
      %p63 = por %p61, %p62
      %p64 = scmp.ne.s32.totalorder %s52, %s53
      %p65 = scmp.eq.s32.totalorder %s22, 1
      %p66 = por %p64, %p65
      %p68 = scmp.ne.s32.totalorder %s53, %s67
      %p69 = scmp.eq.s32.totalorder %s22, 0
      %p70 = por %p68, %p69
      %s72 = sadd.s32 %s71, 1
      %p75 = scmp.eq.s32.totalorder %s16, 1
      %p76 = scmp.ne.s32.totalorder %s71, %s73
      %p77 = scmp.eq.s32.totalorder %s16, 0
      %p78 = por %p76, %p77
      %p79 = scmp.ne.s32.totalorder %s71, %s73
      %p80 = scmp.eq.s32.totalorder %s21, 1
      %p81 = por %p79, %p80
      %p82 = scmp.ne.s32.totalorder %s73, %s74
      %p83 = scmp.eq.s32.totalorder %s21, 0
      %p84 = por %p82, %p83
      %p85 = scmp.ne.s32.totalorder %s73, %s74
      %p86 = scmp.eq.s32.totalorder %s22, 1
      %p87 = por %p85, %p86
      %p89 = scmp.ne.s32.totalorder %s74, %s88
      %p90 = scmp.eq.s32.totalorder %s22, 0
      %p91 = por %p89, %p90
      %s93 = sadd.s32 %s92, 1
      %p96 = scmp.eq.s32.totalorder %s16, 1
      %p97 = scmp.ne.s32.totalorder %s92, %s94
      %p98 = scmp.eq.s32.totalorder %s16, 0
      %p99 = por %p97, %p98
      %p100 = scmp.ne.s32.totalorder %s92, %s94
      %p101 = scmp.eq.s32.totalorder %s21, 1
      %p102 = por %p100, %p101
      %p103 = scmp.ne.s32.totalorder %s94, %s95
      %p104 = scmp.eq.s32.totalorder %s21, 0
      %p105 = por %p103, %p104
      %p106 = scmp.ne.s32.totalorder %s94, %s95
      %p107 = scmp.eq.s32.totalorder %s22, 1
      %p108 = por %p106, %p107
      %p110 = scmp.ne.s32.totalorder %s95, %s109
      %p111 = scmp.eq.s32.totalorder %s22, 0
      %p112 = por %p110, %p111
      %s113 = ssub.s32 %s16, %s23
      %p114 = scmp.eq.s32.totalorder %s113, 0
      %s116 = sadd.s32 %s115, 1
      %s117 = scalar_select %p114, %s115, %s116
      %p120 = pneg %p114
      %p121 = scmp.eq.s32.totalorder %s16, 1
      %p122 = por %p120, %p121
      %p123 = scmp.ne.s32.totalorder %s115, %s118
      %p124 = scmp.eq.s32.totalorder %s16, 0
      %p125 = por %p123, %p124
      %p126 = scmp.ne.s32.totalorder %s115, %s118
      %p127 = scmp.eq.s32.totalorder %s21, 1
      %p128 = por %p126, %p127
      %p129 = scmp.ne.s32.totalorder %s118, %s119
      %p130 = scmp.eq.s32.totalorder %s21, 0
      %p131 = por %p129, %p130
      %p132 = scmp.ne.s32.totalorder %s118, %s119
      %p133 = scmp.eq.s32.totalorder %s22, 1
      %p134 = por %p132, %p133
      %p136 = scmp.ne.s32.totalorder %s119, %s135
      %p137 = scmp.eq.s32.totalorder %s22, 0
      %p138 = por %p136, %p137
      %p139 = scmp.le.s32.totalorder 1, %s16
      %p140 = scmp.lt.s32.totalorder %s16, 3
      %p141 = pnand %p139, %p140
      %p142 = pneg %p141
      // Predicated region
      $region9: #{tpu_custom_call.1} parent=5 // pred_check
        _
      $region10: #{tpu_custom_call.1} parent=5 // pred_check_branch
        %144 = sbr.rel (%p141) target = $region12
      $region11: #{tpu_custom_call.1} parent=5 // pred_region
        %s145 = ssub.s32 %s16, 1
        // Predicated region
        $region13: #{tpu_custom_call.1} parent=11 // pred_check
          %p146 = pneg %p63
        $region14: #{tpu_custom_call.1} parent=11 // pred_check_branch
          %148 = sbr.rel (%p146) target = $region16
        $region15: #{tpu_custom_call.1} parent=11 // pred_region
          _
        $region16: #{tpu_custom_call.1} parent=11 // pred_fallthru
          _
        // Predicated region
        $region17: #{tpu_custom_call.1} parent=11 // pred_check
          %p149 = pneg %p84
        $region18: #{tpu_custom_call.1} parent=11 // pred_check_branch
          %151 = sbr.rel (%p149) target = $region20
        $region19: #{tpu_custom_call.1} parent=11 // pred_region
          _
        $region20: #{tpu_custom_call.1} parent=11 // pred_fallthru
          _
        // Predicated region
        $region21: #{tpu_custom_call.1} parent=11 // pred_check
          %p152 = pneg %p105
        $region22: #{tpu_custom_call.1} parent=11 // pred_check_branch
          %154 = sbr.rel (%p152) target = $region24
        $region23: #{tpu_custom_call.1} parent=11 // pred_region
          _
        $region24: #{tpu_custom_call.1} parent=11 // pred_fallthru
          _
      $region12: #{tpu_custom_call.1} parent=5 // pred_fallthru
        _
      %p155 = scmp.lt.s32.totalorder %s16, 2
      // Predicated region
      $region25: #{tpu_custom_call.1} parent=5 // pred_check
        %p156 = pneg %p155
      $region26: #{tpu_custom_call.1} parent=5 // pred_check_branch
        %158 = sbr.rel (%p156) target = $region28
      $region27: #{tpu_custom_call.1} parent=5 // pred_region
        // Predicated region
        $region29: #{tpu_custom_call.1} parent=27 // pred_check
          %p159 = pneg %p36
        $region30: #{tpu_custom_call.1} parent=27 // pred_check_branch
          %161 = sbr.rel (%p159) target = $region32
        $region31: #{tpu_custom_call.1} parent=27 // pred_region
          %s162 = sand.u32 %s26, 1
          %s163 = scalar_lea.sflag [#allocation3], %s162
          %s164 = sand.u32 %s26, 1
          %s165 = smul.addr %s164, 16
          %s166 = scalar_lea.vmem [#allocation2], %s165
          %s168 = ssub.s32 256, 256
          %169 = vsyncadd %s163, %s168
          %s170 = smul.addr %s16, 2
          %s171 = smul.addr %s170, 128
          %s172 = scalar_lea.hbm %s0, %s171
          %s174 = sshll.u32 %s166, 4
          %s175 = int_to_ptr.vmem [resolvable:$true] %s174
          %177 = dma.hbm_to_vmem [thread:$0]  %s172, 256, %s175, %s163
        $region32: #{tpu_custom_call.1} parent=27 // pred_fallthru
          _
      $region28: #{tpu_custom_call.1} parent=5 // pred_fallthru
        _
      %p178 = scmp.le.s32.totalorder 1, %s16
      %p179 = scmp.lt.s32.totalorder %s16, 3
      %p180 = pnand %p178, %p179
      %p181 = pneg %p180
      // Predicated region
      $region33: #{tpu_custom_call.1} parent=5 // pred_check
        _
      $region34: #{tpu_custom_call.1} parent=5 // pred_check_branch
        %183 = sbr.rel (%p180) target = $region36
      $region35: #{tpu_custom_call.1} parent=5 // pred_region
        %s184 = ssub.s32 %s16, 1
        %s185 = sand.u32 %s29, 1
        %s186 = scalar_lea.sflag [#allocation3], %s185
        %s187 = sand.u32 %s29, 1
        %s188 = smul.addr %s187, 16
        %s189 = scalar_lea.vmem [#allocation2], %s188
        // Predicated region
        $region37: #{tpu_custom_call.1} parent=35 // pred_check
          %p190 = pneg %p42
        $region38: #{tpu_custom_call.1} parent=35 // pred_check_branch
          %192 = sbr.rel (%p190) target = $region40
        $region39: #{tpu_custom_call.1} parent=35 // pred_region
          %193 = dma.done %s186, 256
        $region40: #{tpu_custom_call.1} parent=35 // pred_fallthru
          _
        %s194 = sand.u32 %s29, 1
        %s195 = scalar_lea.sflag [#allocation3], %s194
        %s196 = sand.u32 %s29, 1
        %s197 = smul.addr %s196, 16
        %s198 = scalar_lea.vmem [#allocation2], %s197
        %p199 = pneg %p42
        %p200 = pneg %p39
        %p201 = pneg %p63
        %p202 = pneg %p60
        %p203 = pneg %p84
        %p204 = pneg %p81
        %p205 = pneg %p105
        %p206 = pneg %p102
        %p207 = pneg %p131
        %p208 = pneg %p128
        %s209 = sand.u32 %s118, 1
        %s210 = scalar_lea.sflag [#allocation4], %s209
        %s211 = sand.u32 %s118, 1
        %s212 = smul.addr %s211, 32
        %s213 = scalar_lea.vmem [#allocation5], %s212
        %v214 = vld [vmem:[%s189] sm:$0xff]
        %v215 = vld [vmem:[%s189 + $0x8] sm:$0xff]
        %v216 = vld [vmem:[%s1] sm:$0xff]
        %v217 = vld [vmem:[%s2] sm:$0xff]
        %v218 = vld [vmem:[%s3] sm:$0xff]
        %v219 = vlaneseq
        %v220 = vand.u32 %v219, 127
        %v221 = vadd.s32 %v220, 128
        %v222 = vshra.s32 %v220, 4
        %v223 = vshra.s32 %v221, 4
        %v224 = vand.u32 %v220, 15
        %v225 = vand.u32 %v221, 15
        %vm226 = vcmp.ge.s32.totalorder %v222, 1
        %vm227 = vcmp.ge.s32.totalorder %v223, 1
        %v228 = vsel %vm226, 1, 0
        %v229 = vsel %vm227, 1, 0
        %vm230 = vcmp.eq.s32.totalorder %v228, 1
        %vm231 = vcmp.eq.s32.totalorder %v229, 1
        %vm232 = vcmp.lt.s32.totalorder %v222, 15
        %vm233 = vcmp.lt.s32.totalorder %v223, 15
        %v234 = vsel %vm232, 1, 0
        %v235 = vsel %vm233, 1, 0
        %vm236 = vcmp.eq.s32.totalorder %v234, 1
        %vm237 = vcmp.eq.s32.totalorder %v235, 1
        %vm238 = vcmp.ge.s32.totalorder %v224, 1
        %vm239 = vcmp.ge.s32.totalorder %v225, 1
        %v240 = vsel %vm238, 1, 0
        %v241 = vsel %vm239, 1, 0
        %vm242 = vcmp.eq.s32.totalorder %v240, 1
        %vm243 = vcmp.eq.s32.totalorder %v241, 1
        %vm244 = vcmp.lt.s32.totalorder %v224, 15
        %vm245 = vcmp.lt.s32.totalorder %v225, 15
        %v246 = vsel %vm244, 1, 0
        %v247 = vsel %vm245, 1, 0
        %vm248 = vcmp.eq.s32.totalorder %v246, 1
        %vm249 = vcmp.eq.s32.totalorder %v247, 1
        %250 = vrot.lane.b32.xlu0 %v214, 17
        %v251 = vpop.permute.xlu0 %250
        %252 = vrot.lane.b32.xlu0 %v215, 17
        %v253 = vpop.permute.xlu0 %252
        %vm254 = vcmp.lt.s32.totalorder %v220, 17
        %v255 = vsel %vm254, %v251, %v253
        %v256 = vsel %vm254, %v253, %v251
        %vm257 = vmand %vm230, %vm242
        %vm258 = vmand %vm231, %vm243
        %v259 = vsel %vm257, %v256, 0.0
        %v260 = vsel %vm258, %v255, 0.0
        %262 = vset.pattern.permute.xlu0 0
        %263 = vperm.xlu0 %262, %v216
        %v264 = vpop.permute.xlu0 %263
        %v266 = vmul.f32 %v259, %v264
        %v267 = vmul.f32 %v260, %v264
        %v268 = vadd.f32 %v266, 0.0
        %v269 = vadd.f32 %v267, 0.0
        %270 = vrot.lane.b32.xlu0 %v214, 16
        %v271 = vpop.permute.xlu0 %270
        %272 = vrot.lane.b32.xlu0 %v215, 16
        %v273 = vpop.permute.xlu0 %272
        %vm274 = vcmp.lt.s32.totalorder %v220, 16
        %v275 = vsel %vm274, %v271, %v273
        %v276 = vsel %vm274, %v273, %v271
        %v277 = vsel %vm230, %v276, 0.0
        %v278 = vsel %vm231, %v275, 0.0
        %279 = vset.pattern.permute.xlu0 1
        %280 = vperm.xlu0 %279, %v216
        %v281 = vpop.permute.xlu0 %280
        %v283 = vmul.f32 %v277, %v281
        %v284 = vmul.f32 %v278, %v281
        %v285 = vadd.f32 %v268, %v283
        %v286 = vadd.f32 %v269, %v284
        %287 = vrot.lane.b32.xlu0 %v214, 15
        %v288 = vpop.permute.xlu0 %287
        %289 = vrot.lane.b32.xlu0 %v215, 15
        %v290 = vpop.permute.xlu0 %289
        %vm291 = vcmp.lt.s32.totalorder %v220, 15
        %v292 = vsel %vm291, %v288, %v290
        %v293 = vsel %vm291, %v290, %v288
        %vm294 = vmand %vm230, %vm248
        %vm295 = vmand %vm231, %vm249
        %v296 = vsel %vm294, %v293, 0.0
        %v297 = vsel %vm295, %v292, 0.0
        %298 = vset.pattern.permute.xlu0 2
        %299 = vperm.xlu0 %298, %v216
        %v300 = vpop.permute.xlu0 %299
        %v302 = vmul.f32 %v296, %v300
        %v303 = vmul.f32 %v297, %v300
        %v304 = vadd.f32 %v285, %v302
        %v305 = vadd.f32 %v286, %v303
        %306 = vrot.lane.b32.xlu0 %v214, 1
        %v307 = vpop.permute.xlu0 %306
        %308 = vrot.lane.b32.xlu0 %v215, 1
        %v309 = vpop.permute.xlu0 %308
        %vm310 = vcmp.lt.s32.totalorder %v220, 1
        %v311 = vsel %vm310, %v307, %v309
        %v312 = vsel %vm310, %v309, %v307
        %v313 = vsel %vm242, %v312, 0.0
        %v314 = vsel %vm243, %v311, 0.0
        %315 = vset.pattern.permute.xlu0 3
        %316 = vperm.xlu0 %315, %v216
        %v317 = vpop.permute.xlu0 %316
        %v319 = vmul.f32 %v313, %v317
        %v320 = vmul.f32 %v314, %v317
        %v321 = vadd.f32 %v304, %v319
        %v322 = vadd.f32 %v305, %v320
        %323 = vset.pattern.permute.xlu0 4
        %324 = vperm.xlu0 %323, %v216
        %v325 = vpop.permute.xlu0 %324
        %v327 = vmul.f32 %v214, %v325
        %v328 = vmul.f32 %v215, %v325
        %v329 = vadd.f32 %v321, %v327
        %v330 = vadd.f32 %v322, %v328
        %331 = vrot.lane.b32.xlu0 %v214, 127
        %v332 = vpop.permute.xlu0 %331
        %333 = vrot.lane.b32.xlu0 %v215, 127
        %v334 = vpop.permute.xlu0 %333
        %vm335 = vcmp.lt.s32.totalorder %v220, 127
        %v336 = vsel %vm335, %v332, %v334
        %v337 = vsel %vm335, %v334, %v332
        %v338 = vsel %vm248, %v336, 0.0
        %v339 = vsel %vm249, %v337, 0.0
        %340 = vset.pattern.permute.xlu0 5
        %341 = vperm.xlu0 %340, %v216
        %v342 = vpop.permute.xlu0 %341
        %v344 = vmul.f32 %v338, %v342
        %v345 = vmul.f32 %v339, %v342
        %v346 = vadd.f32 %v329, %v344
        %v347 = vadd.f32 %v330, %v345
        %348 = vrot.lane.b32.xlu0 %v214, 113
        %v349 = vpop.permute.xlu0 %348
        %350 = vrot.lane.b32.xlu0 %v215, 113
        %v351 = vpop.permute.xlu0 %350
        %vm352 = vcmp.lt.s32.totalorder %v220, 113
        %v353 = vsel %vm352, %v349, %v351
        %v354 = vsel %vm352, %v351, %v349
        %vm355 = vmand %vm236, %vm242
        %vm356 = vmand %vm237, %vm243
        %v357 = vsel %vm355, %v353, 0.0
        %v358 = vsel %vm356, %v354, 0.0
        %359 = vset.pattern.permute.xlu0 6
        %360 = vperm.xlu0 %359, %v216
        %v361 = vpop.permute.xlu0 %360
        %v363 = vmul.f32 %v357, %v361
        %v364 = vmul.f32 %v358, %v361
        %v365 = vadd.f32 %v346, %v363
        %v366 = vadd.f32 %v347, %v364
        %367 = vrot.lane.b32.xlu0 %v214, 112
        %v368 = vpop.permute.xlu0 %367
        %369 = vrot.lane.b32.xlu0 %v215, 112
        %v370 = vpop.permute.xlu0 %369
        %vm371 = vcmp.lt.s32.totalorder %v220, 112
        %v372 = vsel %vm371, %v368, %v370
        %v373 = vsel %vm371, %v370, %v368
        %v374 = vsel %vm236, %v372, 0.0
        %v375 = vsel %vm237, %v373, 0.0
        %376 = vset.pattern.permute.xlu0 7
        %377 = vperm.xlu0 %376, %v216
        %v378 = vpop.permute.xlu0 %377
        %v380 = vmul.f32 %v374, %v378
        %v381 = vmul.f32 %v375, %v378
        %v382 = vadd.f32 %v365, %v380
        %v383 = vadd.f32 %v366, %v381
        %384 = vrot.lane.b32.xlu0 %v214, 111
        %v385 = vpop.permute.xlu0 %384
        %386 = vrot.lane.b32.xlu0 %v215, 111
        %v387 = vpop.permute.xlu0 %386
        %vm388 = vcmp.lt.s32.totalorder %v220, 111
        %v389 = vsel %vm388, %v385, %v387
        %v390 = vsel %vm388, %v387, %v385
        %vm391 = vmand %vm236, %vm248
        %vm392 = vmand %vm237, %vm249
        %v393 = vsel %vm391, %v389, 0.0
        %v394 = vsel %vm392, %v390, 0.0
        %395 = vset.pattern.permute.xlu0 8
        %396 = vperm.xlu0 %395, %v216
        %v397 = vpop.permute.xlu0 %396
        %v399 = vmul.f32 %v393, %v397
        %v400 = vmul.f32 %v394, %v397
        %v401 = vadd.f32 %v382, %v399
        %v402 = vadd.f32 %v383, %v400
        %404 = vset.pattern.permute.xlu0 0
        %405 = vperm.xlu0 %404, %v217
        %v406 = vpop.permute.xlu0 %405
        %v408 = vlaneseq
        %v409 = vshrl.u32 %v408, 7
        %v410 = vsub.s32 0, %v409
        %v411 = vrot.slane %v401, %v410
        %v412 = vlaneseq
        %v413 = vshrl.u32 %v412, 7
        %v414 = vsub.s32 0, %v413
        %v415 = vrot.slane %v402, %v414
        %v416 = vmul.f32 %v406, %v411
        %v417 = vmul.f32 %v406, %v415
        %v418 = vadd.f32 %v416, 0.0
        %v419 = vadd.f32 %v417, 0.0
        %420 = vset.pattern.permute.xlu0 1
        %421 = vperm.xlu0 %420, %v217
        %v422 = vpop.permute.xlu0 %421
        %v424 = vlaneseq
        %v425 = vshrl.u32 %v424, 7
        %v426 = vsub.s32 1, %v425
        %v427 = vrot.slane %v401, %v426
        %v428 = vlaneseq
        %v429 = vshrl.u32 %v428, 7
        %v430 = vsub.s32 1, %v429
        %v431 = vrot.slane %v402, %v430
        %v432 = vmul.f32 %v422, %v427
        %v433 = vmul.f32 %v422, %v431
        %v434 = vadd.f32 %v418, %v432
        %v435 = vadd.f32 %v419, %v433
        %436 = vset.pattern.permute.xlu0 2
        %437 = vperm.xlu0 %436, %v217
        %v438 = vpop.permute.xlu0 %437
        %v440 = vlaneseq
        %v441 = vshrl.u32 %v440, 7
        %v442 = vsub.s32 2, %v441
        %v443 = vrot.slane %v401, %v442
        %v444 = vlaneseq
        %v445 = vshrl.u32 %v444, 7
        %v446 = vsub.s32 2, %v445
        %v447 = vrot.slane %v402, %v446
        %v448 = vmul.f32 %v438, %v443
        %v449 = vmul.f32 %v438, %v447
        %v450 = vadd.f32 %v434, %v448
        %v451 = vadd.f32 %v435, %v449
        %452 = vset.pattern.permute.xlu0 3
        %453 = vperm.xlu0 %452, %v217
        %v454 = vpop.permute.xlu0 %453
        %v456 = vlaneseq
        %v457 = vshrl.u32 %v456, 7
        %v458 = vsub.s32 3, %v457
        %v459 = vrot.slane %v401, %v458
        %v460 = vlaneseq
        %v461 = vshrl.u32 %v460, 7
        %v462 = vsub.s32 3, %v461
        %v463 = vrot.slane %v402, %v462
        %v464 = vmul.f32 %v454, %v459
        %v465 = vmul.f32 %v454, %v463
        %v466 = vadd.f32 %v450, %v464
        %v467 = vadd.f32 %v451, %v465
        %469 = vset.pattern.permute.xlu0 0
        %470 = vperm.xlu0 %469, %v218
        %v471 = vpop.permute.xlu0 %470
        %v473 = vadd.f32 %v466, %v471
        %v474 = vadd.f32 %v467, %v471
        %v475 = vlaneseq
        %v476 = vshrl.u32 %v475, 7
        %v477 = vsub.s32 4, %v476
        %v478 = vrot.slane %v401, %v477
        %v479 = vlaneseq
        %v480 = vshrl.u32 %v479, 7
        %v481 = vsub.s32 4, %v480
        %v482 = vrot.slane %v402, %v481
        %v483 = vmul.f32 %v406, %v478
        %v484 = vmul.f32 %v406, %v482
        %v485 = vadd.f32 %v483, 0.0
        %v486 = vadd.f32 %v484, 0.0
        %v487 = vlaneseq
        %v488 = vshrl.u32 %v487, 7
        %v489 = vsub.s32 5, %v488
        %v490 = vrot.slane %v401, %v489
        %v491 = vlaneseq
        %v492 = vshrl.u32 %v491, 7
        %v493 = vsub.s32 5, %v492
        %v494 = vrot.slane %v402, %v493
        %v495 = vmul.f32 %v422, %v490
        %v496 = vmul.f32 %v422, %v494
        %v497 = vadd.f32 %v485, %v495
        %v498 = vadd.f32 %v486, %v496
        %v499 = vlaneseq
        %v500 = vshrl.u32 %v499, 7
        %v501 = vsub.s32 6, %v500
        %v502 = vrot.slane %v401, %v501
        %v503 = vlaneseq
        %v504 = vshrl.u32 %v503, 7
        %v505 = vsub.s32 6, %v504
        %v506 = vrot.slane %v402, %v505
        %v507 = vmul.f32 %v438, %v502
        %v508 = vmul.f32 %v438, %v506
        %v509 = vadd.f32 %v497, %v507
        %v510 = vadd.f32 %v498, %v508
        %v511 = vlaneseq
        %v512 = vshrl.u32 %v511, 7
        %v513 = vsub.s32 7, %v512
        %v514 = vrot.slane %v401, %v513
        %v515 = vlaneseq
        %v516 = vshrl.u32 %v515, 7
        %v517 = vsub.s32 7, %v516
        %v518 = vrot.slane %v402, %v517
        %v519 = vmul.f32 %v454, %v514
        %v520 = vmul.f32 %v454, %v518
        %v521 = vadd.f32 %v509, %v519
        %v522 = vadd.f32 %v510, %v520
        %v523 = vadd.f32 %v521, %v471
        %v524 = vadd.f32 %v522, %v471
        %525 = vst [vmem:[%s213] sm:$0xff] %v473
        %526 = vst [vmem:[%s213 + $0x8] sm:$0xff] %v474
        %527 = vst [vmem:[%s213 + $0x10] sm:$0xff] %v523
        %528 = vst [vmem:[%s213 + $0x18] sm:$0xff] %v524
        %s529 = sand.u32 %s118, 1
        %s530 = scalar_lea.sflag [#allocation4], %s529
        %s531 = sand.u32 %s118, 1
        %s532 = smul.addr %s531, 32
        %s533 = scalar_lea.vmem [#allocation5], %s532
        // Predicated region
        $region41: #{tpu_custom_call.1} parent=35 // pred_check
          %p534 = pneg %p128
        $region42: #{tpu_custom_call.1} parent=35 // pred_check_branch
          %536 = sbr.rel (%p534) target = $region44
        $region43: #{tpu_custom_call.1} parent=35 // pred_region
          %s538 = ssub.s32 512, 512
          %539 = vsyncadd %s530, %s538
          %s540 = smul.addr %s21, 4
          %s541 = smul.addr %s540, 128
          %s542 = scalar_lea.hbm %s4, %s541
          %s543 = sshll.u32 %s533, 4
          %s544 = int_to_ptr.vmem [resolvable:$true] %s543
          %549 = dma.vmem_to_hbm [thread:$0]  %s544, 512, %s542, %s530, 256, 256, 16
        $region44: #{tpu_custom_call.1} parent=35 // pred_fallthru
          _
      $region36: #{tpu_custom_call.1} parent=5 // pred_fallthru
        _
      %p550 = scmp.le.s32.totalorder 2, %s16
      // Predicated region
      $region45: #{tpu_custom_call.1} parent=5 // pred_check
        %p551 = pneg %p550
      $region46: #{tpu_custom_call.1} parent=5 // pred_check_branch
        %553 = sbr.rel (%p551) target = $region48
      $region47: #{tpu_custom_call.1} parent=5 // pred_region
        %s554 = ssub.s32 %s16, 2
        // Predicated region
        $region49: #{tpu_custom_call.1} parent=47 // pred_check
          %p555 = pneg %p134
        $region50: #{tpu_custom_call.1} parent=47 // pred_check_branch
          %557 = sbr.rel (%p555) target = $region52
        $region51: #{tpu_custom_call.1} parent=47 // pred_region
          %s558 = sand.u32 %s119, 1
          %s559 = scalar_lea.sflag [#allocation4], %s558
          %s560 = sand.u32 %s119, 1
          %s561 = smul.addr %s560, 32
          %s562 = scalar_lea.vmem [#allocation5], %s561
          %563 = dma.done %s559, 512
        $region52: #{tpu_custom_call.1} parent=47 // pred_fallthru
          _
      $region48: #{tpu_custom_call.1} parent=5 // pred_fallthru
        _
    $region6: #{tpu_custom_call.1} parent=1 // loop_footer
      %s20 = sadd.s32 1, %s16
    $region7: #{tpu_custom_call.1} parent=1 // loop_footer_branch
      %15 = sbr.rel target = $region3
    $region8: #{tpu_custom_call.1} parent=1 // loop_exit
      _
    %564 = vsyncpa [#allocation3], 1
    %s565 = scalar_lea.sflag [#allocation3], 1
    %566 = vsyncpa %s565, 1
    %567 = vsyncpa [#allocation4], 1
    %s568 = scalar_lea.sflag [#allocation4], 1
    %569 = vsyncpa %s568, 1

</llo_original>
